<compile_context>
chip_gen: v7x
topology: tpu7x:2x2x1
jax: 0.10.0
libtpu: 0.0.40
codegen_flags: <defaults>
</compile_context>

<pallas_src>
import functools

import jax
import jax.numpy as jnp
from jax import lax
from jax.experimental import pallas as pl
from jax.experimental.pallas import tpu as pltpu


_SENTINEL = 1.0e17  # padded points land ~1e34 away from any real point (f32-safe)


def _round_up(x, m):
    return ((x + m - 1) // m) * m


def _vmem_limit_bytes(needed):
    # Clamp to the chip's physical VMEM (v7x: 64 MiB per TensorCore) instead of a
    # blanket 96 MiB request; keep headroom for the auto-pipeline's own buffers.
    try:
        info = pltpu.get_tpu_info()
        cap = int(getattr(info, "vmem_capacity_bytes", 64 * 2 ** 20))
    except Exception:  # pragma: no cover - conservative fallback
        cap = 64 * 2 ** 20
    hard_cap = min((cap * 3) // 4, 96 * 2 ** 20)
    return int(min(max(needed, 32 * 2 ** 20), hard_cap))


# ----------------------------------------------------------------------------------
# Packed single-tile kernel: whole point clouds fit one tile; several batch elements
# are processed per grid step with a static unrolled loop.
# ----------------------------------------------------------------------------------
def _hausdorff_small_kernel(rows_ref, cols_ref, out1_ref, out2_ref, *,
                            n_rows, n_cols, bt, mask_rows, mask_cols):
    # rows_ref: (Bt, N2_pad, D)  row points (i -> sublanes of the distance tile)
    # cols_ref: (Bt, D, N1_pad)  col points, pre-scaled by -2 (j -> lanes)
    # out1_ref/out2_ref: (Bt, 1, 128) lane-dense scalar outputs
    neg_inf = jnp.float32(-jnp.inf)
    for b in range(bt):
        g = rows_ref[b].astype(jnp.float32)     # (N2_pad, D)
        p = cols_ref[b].astype(jnp.float32)     # (D, N1_pad), already * -2
        t2, d = g.shape
        t1 = p.shape[1]

        # Pairwise squared distances on the VPU (no MXU, no full-tile masks:
        # padded points carry the large sentinel coordinate instead).
        rx = jnp.zeros((t2, 1), jnp.float32)
        ry = jnp.zeros((1, t1), jnp.float32)
        zz = jnp.zeros((t2, t1), jnp.float32)
        for c in range(d):
            gc = g[:, c:c + 1]
            pc = p[c:c + 1, :]
            rx = rx + gc * gc
            ry = ry + pc * pc                   # = 4 * ||col_j||^2  (pre-scaled cols)
            zz = zz + gc * pc                   # = -2 <row_i, col_j>
        dist = zz + rx + 0.25 * ry              # rank-1 corrections broadcast onto zz

        col_min = jnp.min(dist, axis=0, keepdims=True)          # (1, t1)
        if mask_cols:
            j_ids = lax.broadcasted_iota(jnp.int32, (1, t1), 1)
            col_min = jnp.where(j_ids < n_cols, col_min, neg_inf)
        out1 = jnp.max(col_min)                                  # max_j min_i

        row_min = jnp.min(dist, axis=1, keepdims=True)           # (t2, 1)
        if mask_rows:
            i_ids = lax.broadcasted_iota(jnp.int32, (t2, 1), 0)
            row_min = jnp.where(i_ids < n_rows, row_min, neg_inf)
        out2 = jnp.max(row_min)                                  # max_i min_j

        out1_ref[b, :, :] = jnp.broadcast_to(out1, (1, 128)).astype(out1_ref.dtype)
        out2_ref[b, :, :] = jnp.broadcast_to(out2, (1, 128)).astype(out2_ref.dtype)


def _small_call(rows_p, cols_t, B, D, n_rows, n_cols, N2_pad, N1_pad,
                mask_rows, mask_cols):
    # Pack several batch elements per grid step (amortise ~0.35us/step overhead),
    # but keep >= 2 grid steps when B >= 2 so both v7x TensorCores get work.
    Bt = max(1, min(8, -(-B // 2)))
    B_pad = _round_up(B, Bt)
    if B_pad != B:
        rows_p = jnp.pad(rows_p, ((0, B_pad - B), (0, 0), (0, 0)))
        cols_t = jnp.pad(cols_t, ((0, B_pad - B), (0, 0), (0, 0)))

    kernel = functools.partial(_hausdorff_small_kernel,
                               n_rows=n_rows, n_cols=n_cols, bt=Bt,
                               mask_rows=mask_rows, mask_cols=mask_cols)

    vmem_needed = (2 * Bt * N2_pad * 128 * 4          # rows tiles (lane-padded D)
                   + 2 * Bt * 8 * N1_pad * 4          # cols tiles (sublane-padded D)
                   + 4 * Bt * N2_pad * N1_pad * 4     # in-flight full-tile temps
                   + 4 * Bt * 8 * 128 * 4)            # outputs

    out1, out2 = pl.pallas_call(
        kernel,
        out_shape=(jax.ShapeDtypeStruct((B_pad, 1, 128), jnp.float32),
                   jax.ShapeDtypeStruct((B_pad, 1, 128), jnp.float32)),
        grid_spec=pltpu.PrefetchScalarGridSpec(
            num_scalar_prefetch=0,
            grid=(B_pad // Bt,),
            in_specs=[
                pl.BlockSpec((Bt, N2_pad, D), lambda b: (b, 0, 0)),
                pl.BlockSpec((Bt, D, N1_pad), lambda b: (b, 0, 0)),
            ],
            out_specs=[
                pl.BlockSpec((Bt, 1, 128), lambda b: (b, 0, 0)),
                pl.BlockSpec((Bt, 1, 128), lambda b: (b, 0, 0)),
            ],
        ),
        compiler_params=pltpu.CompilerParams(
            dimension_semantics=("parallel",),
            vmem_limit_bytes=_vmem_limit_bytes(vmem_needed),
        ),
    )(rows_p, cols_t)
    return out1[:B, 0, 0], out2[:B, 0, 0]


# ----------------------------------------------------------------------------------
# Streaming tiled kernel: the (rows x cols) distance matrix is never materialised.
# ----------------------------------------------------------------------------------
def _hausdorff_tiled_kernel(rows_ref, cols_ref, out1_ref, out2_ref,
                            acc_min_i, acc_min_j, max1_acc, *,
                            n_rows, n_cols, mask_rows, mask_cols):
    # rows_ref: (1, T2, D)     row-point tile (i -> sublanes)
    # cols_ref: (1, D, T1)     col-point tile, pre-scaled by -2 (j -> lanes)
    # acc_min_i: (T2, T1)      running min over row tiles (inner grid axis)
    # acc_min_j: (N2_pad, 128) running min over col tiles, per row point
    # max1_acc:  (1, 128)      running max over cols of (min over rows)
    #
    # Grid is (B, jt, it) with `it` (row tiles) INNERMOST: _finalize_jt relies on all
    # row tiles of this col tile having been folded.  Do not reorder the grid.
    jt = pl.program_id(1)
    it = pl.program_id(2)
    nj = pl.num_programs(1)
    ni = pl.num_programs(2)

    g = rows_ref[0].astype(jnp.float32)    # (T2, D)
    p = cols_ref[0].astype(jnp.float32)    # (D, T1), already * -2
    t2, d = g.shape
    t1 = p.shape[1]

    # Pairwise squared distances on the VPU (no MXU, no full-tile padding masks:
    # padded points carry the large sentinel coordinate instead).
    rx = jnp.zeros((t2, 1), jnp.float32)
    ry = jnp.zeros((1, t1), jnp.float32)
    zz = jnp.zeros((t2, t1), jnp.float32)
    for c in range(d):
        gc = g[:, c:c + 1]
        pc = p[c:c + 1, :]
        rx = rx + gc * gc
        ry = ry + pc * pc                  # = 4 * ||col_j||^2  (pre-scaled cols)
        zz = zz + gc * pc                  # = -2 <row_i, col_j>
    dist = zz + rx + 0.25 * ry             # (T2, T1), rank-1 corrections broadcast

    neg_inf = jnp.float32(-jnp.inf)

    # ---- out1 = max_j min_i : fold over row tiles (inner axis). ----
    @pl.when(jnp.logical_and(jt == 0, it == 0))
    def _init_max1():
        max1_acc[...] = jnp.full(max1_acc.shape, neg_inf, max1_acc.dtype)

    @pl.when(it == 0)
    def _init_min_i():
        acc_min_i[...] = dist

    @pl.when(it != 0)
    def _fold_min_i():
        acc_min_i[...] = jnp.minimum(acc_min_i[...], dist)

    @pl.when(it == ni - 1)
    def _finalize_jt():
        # Single cross-sublane reduce per col tile: min over all row points.
        col_min = jnp.min(acc_min_i[...], axis=0, keepdims=True)   # (1, T1)
        if mask_cols:
            j_ids = jt * t1 + lax.broadcasted_iota(jnp.int32, (1, t1), 1)
            col_min = jnp.where(j_ids < n_cols, col_min, neg_inf)
        cur = max1_acc[...]
        for c in range(t1 // 128):
            cur = jnp.maximum(cur, col_min[:, c * 128:(c + 1) * 128])
        max1_acc[...] = cur

    # ---- out2 = max_i min_j : fold over col tiles (outer axis). ----
    m = dist[:, 0:128]
    for c in range(1, t1 // 128):
        m = jnp.minimum(m, dist[:, c * 128:(c + 1) * 128])

    row_start = pl.multiple_of(it * t2, t2)
    row_slice = pl.ds(row_start, t2)

    @pl.when(jt == 0)
    def _init_min_j():
        acc_min_j[row_slice, :] = m

    @pl.when(jt != 0)
    def _fold_min_j():
        acc_min_j[row_slice, :] = jnp.minimum(acc_min_j[row_slice, :], m)

    # ---- Final step of this batch element: reduce once, write lane-dense outputs. ----
    @pl.when(jnp.logical_and(jt == nj - 1, it == ni - 1))
    def _finalize_batch():
        out1 = jnp.max(max1_acc[...])                               # scalar

        n2_pad = acc_min_j.shape[0]
        row_min = jnp.min(acc_min_j[...], axis=1, keepdims=True)    # (N2_pad, 1)
        if mask_rows:
            all_i = lax.broadcasted_iota(jnp.int32, (n2_pad, 1), 0)
            row_min = jnp.where(all_i < n_rows, row_min, neg_inf)
        out2 = jnp.max(row_min)                                     # scalar

        out1_ref[...] = jnp.broadcast_to(out1, out1_ref.shape).astype(out1_ref.dtype)
        out2_ref[...] = jnp.broadcast_to(out2, out2_ref.shape).astype(out2_ref.dtype)


def _tiled_call(rows_p, cols_t, B, D, n_rows, n_cols, N2_pad, N1_pad, T2, T1,
                mask_rows, mask_cols):
    nj = N1_pad // T1
    ni = N2_pad // T2

    vmem_needed = (2 * T2 * 128 * 4            # rows tiles (D lane-padded in VMEM)
                   + 2 * 8 * T1 * 4            # cols tiles (D sublane-padded)
                   + 4 * T2 * T1 * 4           # acc_min_i + in-flight full-tile temps
                   + N2_pad * 128 * 4          # acc_min_j
                   + 6 * 8 * 128 * 4)          # max1_acc + double-buffered outputs

    kernel = functools.partial(_hausdorff_tiled_kernel,
                               n_rows=n_rows, n_cols=n_cols,
                               mask_rows=mask_rows, mask_cols=mask_cols)

    out1, out2 = pl.pallas_call(
        kernel,
        out_shape=(jax.ShapeDtypeStruct((B, 1, 128), jnp.float32),
                   jax.ShapeDtypeStruct((B, 1, 128), jnp.float32)),
        grid_spec=pltpu.PrefetchScalarGridSpec(
            num_scalar_prefetch=0,
            grid=(B, nj, ni),
            in_specs=[
                pl.BlockSpec((1, T2, D), lambda b, jt, it: (b, it, 0)),   # rows
                pl.BlockSpec((1, D, T1), lambda b, jt, it: (b, 0, jt)),   # cols (x -2)
            ],
            out_specs=[
                pl.BlockSpec((1, 1, 128), lambda b, jt, it: (b, 0, 0)),
                pl.BlockSpec((1, 1, 128), lambda b, jt, it: (b, 0, 0)),
            ],
            scratch_shapes=[
                pltpu.VMEM((T2, T1), jnp.float32),        # acc_min_i
                pltpu.VMEM((N2_pad, 128), jnp.float32),   # acc_min_j (scales w/ rows)
                pltpu.VMEM((1, 128), jnp.float32),        # max1_acc
            ],
        ),
        compiler_params=pltpu.CompilerParams(
            dimension_semantics=("parallel", "arbitrary", "arbitrary"),
            vmem_limit_bytes=_vmem_limit_bytes(vmem_needed),
        ),
    )(rows_p, cols_t)
    return out1[:, 0, 0], out2[:, 0, 0]


# ----------------------------------------------------------------------------------
# Wrapper
# ----------------------------------------------------------------------------------
def _hausdorff_minmax(rows, cols, n_rows, n_cols):
    """rows: [B, n_rows, D] (sublane axis i), cols: [B, n_cols, D] (lane axis j).

    Returns (max_j min_i P, max_i min_j P) with P[i, j] = ||rows_i - cols_j||^2.
    """
    B, _, D = rows.shape

    T1 = min(_round_up(n_cols, 128), 512)     # cols -> lanes
    N1_pad = _round_up(n_cols, T1)
    T2 = min(_round_up(n_rows, 8), 128)       # rows -> sublanes
    N2_pad = _round_up(n_rows, T2)
    nj = N1_pad // T1
    ni = N2_pad // T2
    mask_rows = N2_pad != n_rows
    mask_cols = N1_pad != n_cols

    # Sentinel-pad the point dimension (no per-element masks on the kernel hot path),
    # pre-scale the lane-dense cols copy by -2 (kills the full-tile 2*zz multiply).
    rows_p = jnp.pad(rows, ((0, 0), (0, N2_pad - n_rows), (0, 0)),
                     constant_values=_SENTINEL)
    cols_p = jnp.pad(cols, ((0, 0), (0, N1_pad - n_cols), (0, 0)),
                     constant_values=_SENTINEL)
    cols_t = jnp.transpose(cols_p, (0, 2, 1)) * (-2.0)

    if nj == 1 and ni == 1:
        return _small_call(rows_p, cols_t, B, D, n_rows, n_cols,
                           N2_pad, N1_pad, mask_rows, mask_cols)
    return _tiled_call(rows_p, cols_t, B, D, n_rows, n_cols,
                       N2_pad, N1_pad, T2, T1, mask_rows, mask_cols)


def hausdorff_distance(preds, gts):
    """preds: [B, N1, D], gts: [B, N2, D] -> (loss1 [B], loss2 [B])."""
    B, N1, D = preds.shape
    Bg, N2, Dg = gts.shape
    assert B == Bg and D == Dg

    # Put the smaller point set on the row (sublane) axis so the O(N_rows) per-row
    # min accumulator scales with min(N1, N2); swap the two outputs back.
    if N1 < N2:
        # rows = preds, cols = gts:
        #   out1 = max_{gts} min_{preds} = loss2 ; out2 = max_{preds} min_{gts} = loss1
        out1, out2 = _hausdorff_minmax(preds, gts, N1, N2)
        loss1, loss2 = out2, out1
    else:
        # rows = gts, cols = preds:
        #   out1 = max_{preds} min_{gts} = loss1 ; out2 = max_{gts} min_{preds} = loss2
        loss1, loss2 = _hausdorff_minmax(gts, preds, N2, N1)
    return loss1, loss2


def _hausdorff_reference(preds, gts):
    # Pure-JAX reference mirroring the PyTorch module.
    x, y = gts, preds
    zz = jnp.einsum("bnd,bmd->bnm", x, y)
    rx = jnp.sum(x * x, axis=-1)[:, :, None]
    ry = jnp.sum(y * y, axis=-1)[:, None, :]
    P = rx + ry - 2.0 * zz
    loss1 = jnp.max(jnp.min(P, axis=1), axis=1)
    loss2 = jnp.max(jnp.min(P, axis=2), axis=1)
    return loss1, loss2


if __name__ == "__main__":
    key = jax.random.PRNGKey(0)
    k1, k2, k3, k4 = jax.random.split(key, 4)

    # Small point clouds -> packed single-tile kernel path.
    B, N1, N2, D = 2, 64, 48, 3
    preds = jax.random.normal(k1, (B, N1, D), dtype=jnp.float32)
    gts = jax.random.normal(k2, (B, N2, D), dtype=jnp.float32)

    loss1, loss2 = hausdorff_distance(preds, gts)
    jax.block_until_ready((loss1, loss2))

    ref1, ref2 = _hausdorff_reference(preds, gts)
    assert loss1.shape == (B,) and loss2.shape == (B,)
    assert jnp.allclose(loss1, ref1, atol=1e-4, rtol=1e-4)
    assert jnp.allclose(loss2, ref2, atol=1e-4, rtol=1e-4)

    # Larger clouds -> streaming tiled kernel path (multi-tile grid, both pads).
    B2, N1b, N2b = 2, 600, 200
    preds_b = jax.random.normal(k3, (B2, N1b, D), dtype=jnp.float32)
    gts_b = jax.random.normal(k4, (B2, N2b, D), dtype=jnp.float32)

    loss1_b, loss2_b = hausdorff_distance(preds_b, gts_b)
    jax.block_until_ready((loss1_b, loss2_b))

    ref1_b, ref2_b = _hausdorff_reference(preds_b, gts_b)
    assert jnp.allclose(loss1_b, ref1_b, atol=1e-4, rtol=1e-4)
    assert jnp.allclose(loss2_b, ref2_b, atol=1e-4, rtol=1e-4)

    print("KERNEL_OK")
</pallas_src>

<mosaic_0001>
module attributes {stable_mosaic.version = 11 : i64} {
  func.func @_hausdorff_small_kernel(%arg0: i32, %arg1: memref<1x48x3xf32, #tpu.memory_space<vmem>>, %arg2: memref<1x3x128xf32, #tpu.memory_space<vmem>>, %arg3: memref<1x1x128xf32, #tpu.memory_space<vmem>>, %arg4: memref<1x1x128xf32, #tpu.memory_space<vmem>>) attributes {dimension_semantics = [#tpu.dimension_semantics<parallel>], iteration_bounds = array<i64: 2>, scalar_prefetch = 0 : i64, scratch_operands = 0 : i64, tpu.core_type = #tpu.core_type<tc>, window_params = [{transform_indices = @transform_0, window_bounds = array<i64: 1, 48, 3>}, {transform_indices = @transform_1, window_bounds = array<i64: 1, 3, 128>}, {transform_indices = @transform_2, window_bounds = array<i64: 1, 1, 128>}, {transform_indices = @transform_3, window_bounds = array<i64: 1, 1, 128>}]} {
    %c0 = arith.constant 0 : index
    %c0_0 = arith.constant 0 : index
    %c0_1 = arith.constant 0 : index
    %0 = vector.load %arg1[%c0, %c0_0, %c0_1] : memref<1x48x3xf32, #tpu.memory_space<vmem>>, vector<1x48x3xf32>
    %1 = vector.shape_cast %0 : vector<1x48x3xf32> to vector<48x3xf32>
    %c0_2 = arith.constant 0 : index
    %c0_3 = arith.constant 0 : index
    %c0_4 = arith.constant 0 : index
    %2 = vector.load %arg2[%c0_2, %c0_3, %c0_4] : memref<1x3x128xf32, #tpu.memory_space<vmem>>, vector<1x3x128xf32>
    %3 = vector.shape_cast %2 : vector<1x3x128xf32> to vector<3x128xf32>
    %cst = arith.constant 0.000000e+00 : f32
    %4 = vector.broadcast %cst : f32 to vector<48x1xf32>
    %cst_5 = arith.constant 0.000000e+00 : f32
    %5 = vector.broadcast %cst_5 : f32 to vector<1x128xf32>
    %cst_6 = arith.constant 0.000000e+00 : f32
    %6 = vector.broadcast %cst_6 : f32 to vector<48x128xf32>
    %7 = vector.extract_strided_slice %1 {offsets = [0, 0], sizes = [48, 1], strides = [1, 1]} : vector<48x3xf32> to vector<48x1xf32>
    %8 = vector.extract_strided_slice %3 {offsets = [0, 0], sizes = [1, 128], strides = [1, 1]} : vector<3x128xf32> to vector<1x128xf32>
    %9 = arith.mulf %7, %7 : vector<48x1xf32>
    %10 = arith.addf %4, %9 : vector<48x1xf32>
    %11 = arith.mulf %8, %8 : vector<1x128xf32>
    %12 = arith.addf %5, %11 : vector<1x128xf32>
    %13 = vector.broadcast %7 : vector<48x1xf32> to vector<48x128xf32>
    %14 = vector.broadcast %8 : vector<1x128xf32> to vector<48x128xf32>
    %15 = arith.mulf %13, %14 : vector<48x128xf32>
    %16 = arith.addf %6, %15 : vector<48x128xf32>
    %17 = vector.extract_strided_slice %1 {offsets = [0, 1], sizes = [48, 1], strides = [1, 1]} : vector<48x3xf32> to vector<48x1xf32>
    %18 = vector.extract_strided_slice %3 {offsets = [1, 0], sizes = [1, 128], strides = [1, 1]} : vector<3x128xf32> to vector<1x128xf32>
    %19 = arith.mulf %17, %17 : vector<48x1xf32>
    %20 = arith.addf %10, %19 : vector<48x1xf32>
    %21 = arith.mulf %18, %18 : vector<1x128xf32>
    %22 = arith.addf %12, %21 : vector<1x128xf32>
    %23 = vector.broadcast %17 : vector<48x1xf32> to vector<48x128xf32>
    %24 = vector.broadcast %18 : vector<1x128xf32> to vector<48x128xf32>
    %25 = arith.mulf %23, %24 : vector<48x128xf32>
    %26 = arith.addf %16, %25 : vector<48x128xf32>
    %27 = vector.extract_strided_slice %1 {offsets = [0, 2], sizes = [48, 1], strides = [1, 1]} : vector<48x3xf32> to vector<48x1xf32>
    %28 = vector.extract_strided_slice %3 {offsets = [2, 0], sizes = [1, 128], strides = [1, 1]} : vector<3x128xf32> to vector<1x128xf32>
    %29 = arith.mulf %27, %27 : vector<48x1xf32>
    %30 = arith.addf %20, %29 : vector<48x1xf32>
    %31 = arith.mulf %28, %28 : vector<1x128xf32>
    %32 = arith.addf %22, %31 : vector<1x128xf32>
    %33 = vector.broadcast %27 : vector<48x1xf32> to vector<48x128xf32>
    %34 = vector.broadcast %28 : vector<1x128xf32> to vector<48x128xf32>
    %35 = arith.mulf %33, %34 : vector<48x128xf32>
    %36 = arith.addf %26, %35 : vector<48x128xf32>
    %37 = vector.broadcast %30 : vector<48x1xf32> to vector<48x128xf32>
    %38 = arith.addf %36, %37 : vector<48x128xf32>
    %cst_7 = arith.constant 2.500000e-01 : f32
    %39 = vector.broadcast %cst_7 : f32 to vector<1x128xf32>
    %40 = arith.mulf %39, %32 : vector<1x128xf32>
    %41 = vector.broadcast %40 : vector<1x128xf32> to vector<48x128xf32>
    %42 = arith.addf %38, %41 : vector<48x128xf32>
    %cst_8 = arith.constant dense<0x7F800000> : vector<128xf32>
    %43 = vector.multi_reduction <minimumf>, %42, %cst_8 [0] : vector<48x128xf32> to vector<128xf32>
    %44 = vector.shape_cast %43 : vector<128xf32> to vector<1x128xf32>
    %45 = tpu.iota {dimensions = array<i32: 1>} : vector<1x128xi32>
    %c64_i32 = arith.constant 64 : i32
    %46 = vector.broadcast %c64_i32 : i32 to vector<1x128xi32>
    %47 = arith.cmpi slt, %45, %46 : vector<1x128xi32>
    %cst_9 = arith.constant 0xFF800000 : f32
    %48 = vector.broadcast %cst_9 : f32 to vector<1x128xf32>
    %49 = arith.select %47, %44, %48 : vector<1x128xi1>, vector<1x128xf32>
    %50 = vector.shape_cast %49 : vector<1x128xf32> to vector<1x1x128xf32>
    %cst_10 = arith.constant dense<0xFF800000> : vector<1xf32>
    %51 = vector.multi_reduction <maximumf>, %50, %cst_10 [1, 2] : vector<1x1x128xf32> to vector<1xf32>
    %52 = vector.shape_cast %51 : vector<1xf32> to vector<1x1x1xf32>
    %53 = vector.extract %52[0, 0, 0] : f32 from vector<1x1x1xf32>
    %cst_11 = arith.constant dense<0x7F800000> : vector<48xf32>
    %54 = vector.multi_reduction <minimumf>, %42, %cst_11 [1] : vector<48x128xf32> to vector<48xf32>
    %55 = vector.shape_cast %54 : vector<48xf32> to vector<48x1xf32>
    %56 = vector.shape_cast %55 : vector<48x1xf32> to vector<1x48x1xf32>
    %cst_12 = arith.constant dense<0xFF800000> : vector<1xf32>
    %57 = vector.multi_reduction <maximumf>, %56, %cst_12 [1, 2] : vector<1x48x1xf32> to vector<1xf32>
    %58 = vector.shape_cast %57 : vector<1xf32> to vector<1x1x1xf32>
    %59 = vector.extract %58[0, 0, 0] : f32 from vector<1x1x1xf32>
    %60 = vector.broadcast %53 : f32 to vector<1x128xf32>
    %c0_13 = arith.constant 0 : index
    %c0_14 = arith.constant 0 : index
    %c0_15 = arith.constant 0 : index
    %61 = vector.load %arg3[%c0_13, %c0_14, %c0_15] : memref<1x1x128xf32, #tpu.memory_space<vmem>>, vector<1x1x128xf32>
    %62 = vector.shape_cast %61 : vector<1x1x128xf32> to vector<1x128xf32>
    %63 = vector.shape_cast %60 : vector<1x128xf32> to vector<1x1x128xf32>
    tpu.vector_store %arg3[%c0_13, %c0_14, %c0_15], %63 {strides = array<i32>} : memref<1x1x128xf32, #tpu.memory_space<vmem>>, vector<1x1x128xf32>,
    %64 = vector.broadcast %59 : f32 to vector<1x128xf32>
    %c0_16 = arith.constant 0 : index
    %c0_17 = arith.constant 0 : index
    %c0_18 = arith.constant 0 : index
    %65 = vector.load %arg4[%c0_16, %c0_17, %c0_18] : memref<1x1x128xf32, #tpu.memory_space<vmem>>, vector<1x1x128xf32>
    %66 = vector.shape_cast %65 : vector<1x1x128xf32> to vector<1x128xf32>
    %67 = vector.shape_cast %64 : vector<1x128xf32> to vector<1x1x128xf32>
    tpu.vector_store %arg4[%c0_16, %c0_17, %c0_18], %67 {strides = array<i32>} : memref<1x1x128xf32, #tpu.memory_space<vmem>>, vector<1x1x128xf32>,
    return
  }
  func.func @transform_0(%arg0: i32) -> (i32, i32, i32) {
    %c0_i32 = arith.constant 0 : i32
    %c0_i32_0 = arith.constant 0 : i32
    %c0_i32_1 = arith.constant 0 : i32
    return %arg0, %c0_i32, %c0_i32_0 : i32, i32, i32
  }
  func.func @transform_1(%arg0: i32) -> (i32, i32, i32) {
    %c0_i32 = arith.constant 0 : i32
    %c0_i32_0 = arith.constant 0 : i32
    %c0_i32_1 = arith.constant 0 : i32
    return %arg0, %c0_i32, %c0_i32_0 : i32, i32, i32
  }
  func.func @transform_2(%arg0: i32) -> (i32, i32, i32) {
    %c0_i32 = arith.constant 0 : i32
    %c0_i32_0 = arith.constant 0 : i32
    %c0_i32_1 = arith.constant 0 : i32
    return %arg0, %c0_i32, %c0_i32_0 : i32, i32, i32
  }
  func.func @transform_3(%arg0: i32) -> (i32, i32, i32) {
    %c0_i32 = arith.constant 0 : i32
    %c0_i32_0 = arith.constant 0 : i32
    %c0_i32_1 = arith.constant 0 : i32
    return %arg0, %c0_i32, %c0_i32_0 : i32, i32, i32
  }
}

</mosaic_0001>

<llo_original>
// kernel: tpu_custom_call.1
$region0: #{tpu_custom_call.1}
  #allocation0 [shape = 'u32[]', space=smem, size = 0x4, offset = 0x4, fixed_abs, tag = 'smem constant byte address 0x4 - core index']
  #allocation1 [shape = 'u32[144,128]{1,0:T(1,128)}', space=vmem, size = 0x12000, scoped, tag = 'internal scratch']
  %s0 = inlined_call_operand.vmem [shape: f32[2,48,3], index: 0, kind: input, shape index: {}]
  %s1 = inlined_call_operand.vmem [shape: f32[2,3,128], index: 1, kind: input, shape index: {}]
  %s2 = inlined_call_operand.hbm [shape: f32[2,1,128], index: 2, kind: output, shape index: {0}]
  %s3 = inlined_call_operand.hbm [shape: f32[2,1,128], index: 3, kind: output, shape index: {1}]
  %4 = xla_tuple %s2, %s3
  %s5 = sld [smem:[#allocation0]]
  $region49: #{tpu_custom_call.1} parent=0
    _
  %s7 = ssub.s32 1, %s5
  %s8 = scalar_select 0, %s7, %s5
  $region1: #{tpu_custom_call.1} parent=0
    #allocation2 [shape = 'u8[1024]{0}', space=vmem, size = 0x400, scoped, tag = 'output window, operand 0']
    #allocation3 [shape = 's32[2]{0}', space=sflag, size = 0x8, scoped, tag = 'scoped memory for tpu_custom_call.1']
    #allocation4 [shape = 'u8[1024]{0}', space=vmem, size = 0x400, scoped, tag = 'output window, operand 1']
    #allocation5 [shape = 's32[2]{0}', space=sflag, size = 0x8, scoped, tag = 'scoped memory for tpu_custom_call.1']
    %9 = vsyncpa [#allocation3], 0
    %s10 = scalar_lea.sflag [#allocation3], 1
    %11 = vsyncpa %s10, 0
    %12 = vsyncpa [#allocation5], 0
    %s13 = scalar_lea.sflag [#allocation5], 1
    %14 = vsyncpa %s13, 0
    loop: start=0, step=1, limit=4
    $region2: #{tpu_custom_call.1} parent=1 // loop_pre_header
      _
    $region3: #{tpu_custom_call.1} parent=1 // loop_header
      %s16 = sphi 0, %s20
      %p17 = scmp.ge.s32.totalorder %s16, 4
      %s26 = sphi 0, %s28
      %s29 = sphi 0, %s26
      %s30 = sphi 0, %s29
      %s46 = sphi 0, %s30
      %s52 = sphi 0, %s54
      %s55 = sphi 0, %s52
      %s56 = sphi 0, %s55
      %s72 = sphi 0, %s56
      %s78 = sphi 0, %s80
      %s81 = sphi 0, %s78
      %s82 = sphi 0, %s81
      %s98 = sphi 0, %s82
      %s104 = sphi 0, %s106
      %s107 = sphi 0, %s104
      %s108 = sphi 0, %s107
      %s124 = sphi 0, %s108
    $region4: #{tpu_custom_call.1} parent=1 // loop_header_branch
      %19 = sbr.rel (%p17) target = $region8
    $region5: #{tpu_custom_call.1} parent=1 // loop_body
      %s21 = ssub.s32 %s16, 1
      %s22 = ssub.s32 %s16, 2
      %s23 = sadd.s32 %s16, 1
      %s24 = ssub.s32 %s16, %s23
      %p25 = scmp.eq.s32.totalorder %s24, 0
      %s27 = sadd.s32 %s26, 1
      %s28 = scalar_select %p25, %s26, %s27
      %p31 = pneg %p25
      %p32 = scmp.eq.s32.totalorder %s16, 1
      %p33 = por %p31, %p32
      %p34 = scmp.ne.s32.totalorder %s26, %s29
      %p35 = scmp.eq.s32.totalorder %s16, 0
      %p36 = por %p34, %p35
      %p37 = scmp.ne.s32.totalorder %s26, %s29
      %p38 = scmp.eq.s32.totalorder %s21, 1
      %p39 = por %p37, %p38
      %p40 = scmp.ne.s32.totalorder %s29, %s30
      %p41 = scmp.eq.s32.totalorder %s21, 0
      %p42 = por %p40, %p41
      %p43 = scmp.ne.s32.totalorder %s29, %s30
      %p44 = scmp.eq.s32.totalorder %s22, 1
      %p45 = por %p43, %p44
      %p47 = scmp.ne.s32.totalorder %s30, %s46
      %p48 = scmp.eq.s32.totalorder %s22, 0
      %p49 = por %p47, %p48
      %s50 = ssub.s32 %s16, %s23
      %p51 = scmp.eq.s32.totalorder %s50, 0
      %s53 = sadd.s32 %s52, 1
      %s54 = scalar_select %p51, %s52, %s53
      %p57 = pneg %p51
      %p58 = scmp.eq.s32.totalorder %s16, 1
      %p59 = por %p57, %p58
      %p60 = scmp.ne.s32.totalorder %s52, %s55
      %p61 = scmp.eq.s32.totalorder %s16, 0
      %p62 = por %p60, %p61
      %p63 = scmp.ne.s32.totalorder %s52, %s55
      %p64 = scmp.eq.s32.totalorder %s21, 1
      %p65 = por %p63, %p64
      %p66 = scmp.ne.s32.totalorder %s55, %s56
      %p67 = scmp.eq.s32.totalorder %s21, 0
      %p68 = por %p66, %p67
      %p69 = scmp.ne.s32.totalorder %s55, %s56
      %p70 = scmp.eq.s32.totalorder %s22, 1
      %p71 = por %p69, %p70
      %p73 = scmp.ne.s32.totalorder %s56, %s72
      %p74 = scmp.eq.s32.totalorder %s22, 0
      %p75 = por %p73, %p74
      %s76 = ssub.s32 %s16, %s23
      %p77 = scmp.eq.s32.totalorder %s76, 0
      %s79 = sadd.s32 %s78, 1
      %s80 = scalar_select %p77, %s78, %s79
      %p83 = pneg %p77
      %p84 = scmp.eq.s32.totalorder %s16, 1
      %p85 = por %p83, %p84
      %p86 = scmp.ne.s32.totalorder %s78, %s81
      %p87 = scmp.eq.s32.totalorder %s16, 0
      %p88 = por %p86, %p87
      %p89 = scmp.ne.s32.totalorder %s78, %s81
      %p90 = scmp.eq.s32.totalorder %s21, 1
      %p91 = por %p89, %p90
      %p92 = scmp.ne.s32.totalorder %s81, %s82
      %p93 = scmp.eq.s32.totalorder %s21, 0
      %p94 = por %p92, %p93
      %p95 = scmp.ne.s32.totalorder %s81, %s82
      %p96 = scmp.eq.s32.totalorder %s22, 1
      %p97 = por %p95, %p96
      %p99 = scmp.ne.s32.totalorder %s82, %s98
      %p100 = scmp.eq.s32.totalorder %s22, 0
      %p101 = por %p99, %p100
      %s102 = ssub.s32 %s16, %s23
      %p103 = scmp.eq.s32.totalorder %s102, 0
      %s105 = sadd.s32 %s104, 1
      %s106 = scalar_select %p103, %s104, %s105
      %p109 = pneg %p103
      %p110 = scmp.eq.s32.totalorder %s16, 1
      %p111 = por %p109, %p110
      %p112 = scmp.ne.s32.totalorder %s104, %s107
      %p113 = scmp.eq.s32.totalorder %s16, 0
      %p114 = por %p112, %p113
      %p115 = scmp.ne.s32.totalorder %s104, %s107
      %p116 = scmp.eq.s32.totalorder %s21, 1
      %p117 = por %p115, %p116
      %p118 = scmp.ne.s32.totalorder %s107, %s108
      %p119 = scmp.eq.s32.totalorder %s21, 0
      %p120 = por %p118, %p119
      %p121 = scmp.ne.s32.totalorder %s107, %s108
      %p122 = scmp.eq.s32.totalorder %s22, 1
      %p123 = por %p121, %p122
      %p125 = scmp.ne.s32.totalorder %s108, %s124
      %p126 = scmp.eq.s32.totalorder %s22, 0
      %p127 = por %p125, %p126
      %p128 = scmp.le.s32.totalorder 1, %s16
      %p129 = scmp.lt.s32.totalorder %s16, 3
      %p130 = pnand %p128, %p129
      %p131 = pneg %p130
      // Predicated region
      $region9: #{tpu_custom_call.1} parent=5 // pred_check
        _
      $region10: #{tpu_custom_call.1} parent=5 // pred_check_branch
        %133 = sbr.rel (%p130) target = $region12
      $region11: #{tpu_custom_call.1} parent=5 // pred_region
        %s134 = ssub.s32 %s16, 1
      $region12: #{tpu_custom_call.1} parent=5 // pred_fallthru
        _
      %p135 = scmp.lt.s32.totalorder %s16, 2
      // Predicated region
      $region13: #{tpu_custom_call.1} parent=5 // pred_check
        %p136 = pneg %p135
      $region14: #{tpu_custom_call.1} parent=5 // pred_check_branch
        %138 = sbr.rel (%p136) target = $region16
      $region15: #{tpu_custom_call.1} parent=5 // pred_region
        // Predicated region
        $region17: #{tpu_custom_call.1} parent=15 // pred_check
          %p139 = pneg %p36
        $region18: #{tpu_custom_call.1} parent=15 // pred_check_branch
          %141 = sbr.rel (%p139) target = $region20
        $region19: #{tpu_custom_call.1} parent=15 // pred_region
          %p142 = scmp.lt.s32.totalorder %s16, 1
          %s143 = scalar_select %p142, %s16, 1
          %s144 = smul.addr %s143, 6
          %s145 = smul.addr %s144, 8
          %s146 = scalar_lea.vmem %s0, %s145
        $region20: #{tpu_custom_call.1} parent=15 // pred_fallthru
          _
        // Predicated region
        $region21: #{tpu_custom_call.1} parent=15 // pred_check
          %p147 = pneg %p62
        $region22: #{tpu_custom_call.1} parent=15 // pred_check_branch
          %149 = sbr.rel (%p147) target = $region24
        $region23: #{tpu_custom_call.1} parent=15 // pred_region
          %p150 = scmp.lt.s32.totalorder %s16, 1
          %s151 = scalar_select %p150, %s16, 1
          %s152 = smul.addr %s151, 4
          %s153 = scalar_lea.vmem %s1, %s152
        $region24: #{tpu_custom_call.1} parent=15 // pred_fallthru
          _
      $region16: #{tpu_custom_call.1} parent=5 // pred_fallthru
        _
      %p154 = scmp.le.s32.totalorder 1, %s16
      %p155 = scmp.lt.s32.totalorder %s16, 3
      %p156 = pnand %p154, %p155
      %p157 = pneg %p156
      // Predicated region
      $region25: #{tpu_custom_call.1} parent=5 // pred_check
        _
      $region26: #{tpu_custom_call.1} parent=5 // pred_check_branch
        %159 = sbr.rel (%p156) target = $region28
      $region27: #{tpu_custom_call.1} parent=5 // pred_region
        %s160 = ssub.s32 %s16, 1
        %p161 = scmp.lt.s32.totalorder %s21, 1
        %s162 = scalar_select %p161, %s21, 1
        %s163 = smul.addr %s162, 6
        %s164 = smul.addr %s163, 8
        %s165 = scalar_lea.vmem %s0, %s164
        %p166 = pneg %p42
        %p167 = pneg %p39
        %p168 = scmp.lt.s32.totalorder %s21, 1
        %s169 = scalar_select %p168, %s21, 1
        %s170 = smul.addr %s169, 4
        %s171 = scalar_lea.vmem %s1, %s170
        %p172 = pneg %p68
        %p173 = pneg %p65
        %p174 = pneg %p94
        %p175 = pneg %p91
        %s176 = sand.u32 %s81, 1
        %s177 = scalar_lea.sflag [#allocation3], %s176
        %s178 = sand.u32 %s81, 1
        %s179 = scalar_lea.vmem [#allocation2], %s178
        %p180 = pneg %p120
        %p181 = pneg %p117
        %s182 = sand.u32 %s107, 1
        %s183 = scalar_lea.sflag [#allocation5], %s182
        %s184 = sand.u32 %s107, 1
        %s185 = scalar_lea.vmem [#allocation4], %s184
        %p186 = scmp.lt.s32.totalorder %s21, 1
        %s187 = scalar_select %p186, %s21, 1
        %s188 = smul.addr %s187, 6
        %s189 = smul.addr %s188, 8
        %s190 = scalar_lea.vmem %s0, %s189
        %p191 = scmp.lt.s32.totalorder %s21, 1
        %s192 = scalar_select %p191, %s21, 1
        %s193 = smul.addr %s192, 4
        %s194 = scalar_lea.vmem %s1, %s193
        %v195 = vld [vmem:[%s190] sm:$0xff]
        %v196 = vld [vmem:[%s190 + $0x8] sm:$0xff]
        %v197 = vld [vmem:[%s190 + $0x10] sm:$0xff]
        %v198 = vld [vmem:[%s190 + $0x18] sm:$0xff]
        %v199 = vld [vmem:[%s190 + $0x20] sm:$0xff]
        %v200 = vld [vmem:[%s190 + $0x28] sm:$0xff]
        %v201 = vld [vmem:[%s194] sm:$0x7]
        %v202 = vmul.f32 %v195, %v195
        %v203 = vmul.f32 %v196, %v196
        %v204 = vmul.f32 %v197, %v197
        %v205 = vmul.f32 %v198, %v198
        %v206 = vmul.f32 %v199, %v199
        %v207 = vmul.f32 %v200, %v200
        %v208 = vadd.f32 %v202, 0.0
        %v209 = vadd.f32 %v203, 0.0
        %v210 = vadd.f32 %v204, 0.0
        %v211 = vadd.f32 %v205, 0.0
        %v212 = vadd.f32 %v206, 0.0
        %v213 = vadd.f32 %v207, 0.0
        %v214 = vmul.f32 %v201, %v201
        %v215 = vadd.f32 %v214, 0.0
        %217 = vset.pattern.permute.xlu0 0
        %218 = vperm.xlu0 %217, %v195
        %v219 = vpop.permute.xlu0 %218
        %222 = vset.pattern.permute.xlu0 0
        %223 = vperm.xlu0 %222, %v196
        %v224 = vpop.permute.xlu0 %223
        %227 = vset.pattern.permute.xlu0 0
        %228 = vperm.xlu0 %227, %v197
        %v229 = vpop.permute.xlu0 %228
        %232 = vset.pattern.permute.xlu0 0
        %233 = vperm.xlu0 %232, %v198
        %v234 = vpop.permute.xlu0 %233
        %237 = vset.pattern.permute.xlu0 0
        %238 = vperm.xlu0 %237, %v199
        %v239 = vpop.permute.xlu0 %238
        %242 = vset.pattern.permute.xlu0 0
        %243 = vperm.xlu0 %242, %v200
        %v244 = vpop.permute.xlu0 %243
        %v246 = vlaneseq
        %v247 = vshrl.u32 %v246, 7
        %v248 = vsub.s32 0, %v247
        %v249 = vrot.slane %v201, %v248
        %v250 = vmul.f32 %v219, %v249
        %v251 = vmul.f32 %v224, %v249
        %v252 = vmul.f32 %v229, %v249
        %v253 = vmul.f32 %v234, %v249
        %v254 = vmul.f32 %v239, %v249
        %v255 = vmul.f32 %v244, %v249
        %v256 = vadd.f32 %v250, 0.0
        %v257 = vadd.f32 %v251, 0.0
        %v258 = vadd.f32 %v252, 0.0
        %v259 = vadd.f32 %v253, 0.0
        %v260 = vadd.f32 %v254, 0.0
        %v261 = vadd.f32 %v255, 0.0
        %268 = vrot.lane.b32.xlu0 %v202, 127
        %v269 = vpop.permute.xlu0 %268
        %270 = vrot.lane.b32.xlu0 %v203, 127
        %v271 = vpop.permute.xlu0 %270
        %272 = vrot.lane.b32.xlu0 %v204, 127
        %v273 = vpop.permute.xlu0 %272
        %274 = vrot.lane.b32.xlu0 %v205, 127
        %v275 = vpop.permute.xlu0 %274
        %276 = vrot.lane.b32.xlu0 %v206, 127
        %v277 = vpop.permute.xlu0 %276
        %278 = vrot.lane.b32.xlu0 %v207, 127
        %v279 = vpop.permute.xlu0 %278
        %v286 = vadd.f32 %v208, %v269
        %v287 = vadd.f32 %v209, %v271
        %v288 = vadd.f32 %v210, %v273
        %v289 = vadd.f32 %v211, %v275
        %v290 = vadd.f32 %v212, %v277
        %v291 = vadd.f32 %v213, %v279
        %v293 = vrot.slane %v214, 1
        %v295 = vadd.f32 %v215, %v293
        %296 = vset.pattern.permute.xlu0 1
        %297 = vperm.xlu0 %296, %v195
        %v298 = vpop.permute.xlu0 %297
        %300 = vset.pattern.permute.xlu0 1
        %301 = vperm.xlu0 %300, %v196
        %v302 = vpop.permute.xlu0 %301
        %304 = vset.pattern.permute.xlu0 1
        %305 = vperm.xlu0 %304, %v197
        %v306 = vpop.permute.xlu0 %305
        %308 = vset.pattern.permute.xlu0 1
        %309 = vperm.xlu0 %308, %v198
        %v310 = vpop.permute.xlu0 %309
        %312 = vset.pattern.permute.xlu0 1
        %313 = vperm.xlu0 %312, %v199
        %v314 = vpop.permute.xlu0 %313
        %316 = vset.pattern.permute.xlu0 1
        %317 = vperm.xlu0 %316, %v200
        %v318 = vpop.permute.xlu0 %317
        %v320 = vlaneseq
        %v321 = vshrl.u32 %v320, 7
        %v322 = vsub.s32 1, %v321
        %v323 = vrot.slane %v201, %v322
        %v324 = vmul.f32 %v298, %v323
        %v325 = vmul.f32 %v302, %v323
        %v326 = vmul.f32 %v306, %v323
        %v327 = vmul.f32 %v310, %v323
        %v328 = vmul.f32 %v314, %v323
        %v329 = vmul.f32 %v318, %v323
        %v330 = vadd.f32 %v256, %v324
        %v331 = vadd.f32 %v257, %v325
        %v332 = vadd.f32 %v258, %v326
        %v333 = vadd.f32 %v259, %v327
        %v334 = vadd.f32 %v260, %v328
        %v335 = vadd.f32 %v261, %v329
        %336 = vrot.lane.b32.xlu0 %v202, 126
        %v337 = vpop.permute.xlu0 %336
        %338 = vrot.lane.b32.xlu0 %v203, 126
        %v339 = vpop.permute.xlu0 %338
        %340 = vrot.lane.b32.xlu0 %v204, 126
        %v341 = vpop.permute.xlu0 %340
        %342 = vrot.lane.b32.xlu0 %v205, 126
        %v343 = vpop.permute.xlu0 %342
        %344 = vrot.lane.b32.xlu0 %v206, 126
        %v345 = vpop.permute.xlu0 %344
        %346 = vrot.lane.b32.xlu0 %v207, 126
        %v347 = vpop.permute.xlu0 %346
        %v354 = vadd.f32 %v286, %v337
        %v355 = vadd.f32 %v287, %v339
        %v356 = vadd.f32 %v288, %v341
        %v357 = vadd.f32 %v289, %v343
        %v358 = vadd.f32 %v290, %v345
        %v359 = vadd.f32 %v291, %v347
        %v360 = vrot.slane %v214, 2
        %v362 = vadd.f32 %v295, %v360
        %363 = vset.pattern.permute.xlu0 2
        %364 = vperm.xlu0 %363, %v195
        %v365 = vpop.permute.xlu0 %364
        %367 = vset.pattern.permute.xlu0 2
        %368 = vperm.xlu0 %367, %v196
        %v369 = vpop.permute.xlu0 %368
        %371 = vset.pattern.permute.xlu0 2
        %372 = vperm.xlu0 %371, %v197
        %v373 = vpop.permute.xlu0 %372
        %375 = vset.pattern.permute.xlu0 2
        %376 = vperm.xlu0 %375, %v198
        %v377 = vpop.permute.xlu0 %376
        %379 = vset.pattern.permute.xlu0 2
        %380 = vperm.xlu0 %379, %v199
        %v381 = vpop.permute.xlu0 %380
        %383 = vset.pattern.permute.xlu0 2
        %384 = vperm.xlu0 %383, %v200
        %v385 = vpop.permute.xlu0 %384
        %v387 = vlaneseq
        %v388 = vshrl.u32 %v387, 7
        %v389 = vsub.s32 2, %v388
        %v390 = vrot.slane %v201, %v389
        %v391 = vmul.f32 %v365, %v390
        %v392 = vmul.f32 %v369, %v390
        %v393 = vmul.f32 %v373, %v390
        %v394 = vmul.f32 %v377, %v390
        %v395 = vmul.f32 %v381, %v390
        %v396 = vmul.f32 %v385, %v390
        %v397 = vadd.f32 %v330, %v391
        %v398 = vadd.f32 %v331, %v392
        %v399 = vadd.f32 %v332, %v393
        %v400 = vadd.f32 %v333, %v394
        %v401 = vadd.f32 %v334, %v395
        %v402 = vadd.f32 %v335, %v396
        %404 = vset.pattern.permute.xlu0 0
        %405 = vperm.xlu0 %404, %v354
        %v406 = vpop.permute.xlu0 %405
        %409 = vset.pattern.permute.xlu0 0
        %410 = vperm.xlu0 %409, %v355
        %v411 = vpop.permute.xlu0 %410
        %414 = vset.pattern.permute.xlu0 0
        %415 = vperm.xlu0 %414, %v356
        %v416 = vpop.permute.xlu0 %415
        %419 = vset.pattern.permute.xlu0 0
        %420 = vperm.xlu0 %419, %v357
        %v421 = vpop.permute.xlu0 %420
        %424 = vset.pattern.permute.xlu0 0
        %425 = vperm.xlu0 %424, %v358
        %v426 = vpop.permute.xlu0 %425
        %429 = vset.pattern.permute.xlu0 0
        %430 = vperm.xlu0 %429, %v359
        %v431 = vpop.permute.xlu0 %430
        %v433 = vadd.f32 %v397, %v406
        %v434 = vadd.f32 %v398, %v411
        %v435 = vadd.f32 %v399, %v416
        %v436 = vadd.f32 %v400, %v421
        %v437 = vadd.f32 %v401, %v426
        %v438 = vadd.f32 %v402, %v431
        %v439 = vmul.f32 %v362, 0.25
        %v440 = vlaneseq
        %v441 = vshrl.u32 %v440, 7
        %v442 = vsub.s32 0, %v441
        %v443 = vrot.slane %v439, %v442
        %v444 = vadd.f32 %v433, %v443
        %v445 = vadd.f32 %v434, %v443
        %v446 = vadd.f32 %v435, %v443
        %v447 = vadd.f32 %v436, %v443
        %v448 = vadd.f32 %v437, %v443
        %v449 = vadd.f32 %v438, %v443
        %v450 = vmin.f32 %v444, %v448
        %v451 = vmin.f32 %v445, %v449
        %v452 = vmin.f32 %v450, %v451
        %v453 = vmin.f32 %v446, %v447
        %v454 = vmin.f32 %v452, %v453
        %v455 = vrot.slane %v454, 4
        %v456 = vmin.f32 %v454, %v455
        %v457 = vrot.slane %v456, 2
        %v458 = vmin.f32 %v456, %v457
        %v459 = vrot.slane %v458, 1
        %v460 = vmin.f32 %v458, %v459
        %v461 = vlaneseq
        %v462 = vand.u32 %v461, 127
        %vm463 = vcmp.lt.s32.totalorder %v462, 64
        %v464 = vsel %vm463, %v460, -inf
        %465 = vmax.xlane.f32.xlu0 %v464
        %v466 = vpop.xlane.xlu0 %465
        %s467 = vtos %v466
        %468 = vmin.xlane.f32.xlu0 %v444
        %v469 = vpop.xlane.xlu0 %468
        %470 = vmin.xlane.f32.xlu0 %v445
        %v471 = vpop.xlane.xlu0 %470
        %472 = vmin.xlane.f32.xlu0 %v446
        %v473 = vpop.xlane.xlu0 %472
        %474 = vmin.xlane.f32.xlu0 %v447
        %v475 = vpop.xlane.xlu0 %474
        %476 = vmin.xlane.f32.xlu0 %v448
        %v477 = vpop.xlane.xlu0 %476
        %478 = vmin.xlane.f32.xlu0 %v449
        %v479 = vpop.xlane.xlu0 %478
        %v480 = vmax.f32 %v469, %v477
        %v481 = vmax.f32 %v471, %v479
        %v482 = vmax.f32 %v480, %v481
        %v483 = vmax.f32 %v473, %v475
        %v484 = vmax.f32 %v482, %v483
        %v485 = vrot.slane %v484, 4
        %v486 = vmax.f32 %v484, %v485
        %v487 = vrot.slane %v486, 2
        %v488 = vmax.f32 %v486, %v487
        %v489 = vrot.slane %v488, 1
        %v490 = vmax.f32 %v488, %v489
        %s491 = vtos %v490
        %v492 = vstv %s467
        %493 = vst [vmem:[%s179] sm:$0x1] %v492
        %v494 = vstv %s491
        %495 = vst [vmem:[%s185] sm:$0x1] %v494
        %s496 = sand.u32 %s81, 1
        %s497 = scalar_lea.sflag [#allocation3], %s496
        %s498 = sand.u32 %s81, 1
        %s499 = scalar_lea.vmem [#allocation2], %s498
        %s500 = sand.u32 %s107, 1
        %s501 = scalar_lea.sflag [#allocation5], %s500
        %s502 = sand.u32 %s107, 1
        %s503 = scalar_lea.vmem [#allocation4], %s502
        // Predicated region
        $region29: #{tpu_custom_call.1} parent=27 // pred_check
          %p504 = pneg %p91
        $region30: #{tpu_custom_call.1} parent=27 // pred_check_branch
          %506 = sbr.rel (%p504) target = $region32
        $region31: #{tpu_custom_call.1} parent=27 // pred_region
          %s508 = ssub.s32 16, 16
          %509 = vsyncadd %s497, %s508
          %s510 = smul.addr %s21, 16
          %s511 = scalar_lea.hbm %s2, %s510
          %s513 = sshll.u32 %s499, 4
          %s514 = int_to_ptr.vmem [resolvable:$true] %s513
          %516 = dma.vmem_to_hbm [thread:$0]  %s514, 16, %s511, %s497
        $region32: #{tpu_custom_call.1} parent=27 // pred_fallthru
          _
        // Predicated region
        $region33: #{tpu_custom_call.1} parent=27 // pred_check
          %p517 = pneg %p117
        $region34: #{tpu_custom_call.1} parent=27 // pred_check_branch
          %519 = sbr.rel (%p517) target = $region36
        $region35: #{tpu_custom_call.1} parent=27 // pred_region
          %s521 = ssub.s32 16, 16
          %522 = vsyncadd %s501, %s521
          %s523 = smul.addr %s21, 16
          %s524 = scalar_lea.hbm %s3, %s523
          %s526 = sshll.u32 %s503, 4
          %s527 = int_to_ptr.vmem [resolvable:$true] %s526
          %529 = dma.vmem_to_hbm [thread:$0]  %s527, 16, %s524, %s501
        $region36: #{tpu_custom_call.1} parent=27 // pred_fallthru
          _
      $region28: #{tpu_custom_call.1} parent=5 // pred_fallthru
        _
      %p530 = scmp.le.s32.totalorder 2, %s16
      // Predicated region
      $region37: #{tpu_custom_call.1} parent=5 // pred_check
        %p531 = pneg %p530
      $region38: #{tpu_custom_call.1} parent=5 // pred_check_branch
        %533 = sbr.rel (%p531) target = $region40
      $region39: #{tpu_custom_call.1} parent=5 // pred_region
        %s534 = ssub.s32 %s16, 2
        // Predicated region
        $region41: #{tpu_custom_call.1} parent=39 // pred_check
          %p535 = pneg %p97
        $region42: #{tpu_custom_call.1} parent=39 // pred_check_branch
          %537 = sbr.rel (%p535) target = $region44
        $region43: #{tpu_custom_call.1} parent=39 // pred_region
          %s538 = sand.u32 %s82, 1
          %s539 = scalar_lea.sflag [#allocation3], %s538
          %s540 = sand.u32 %s82, 1
          %s541 = scalar_lea.vmem [#allocation2], %s540
          %542 = dma.done %s539, 16
        $region44: #{tpu_custom_call.1} parent=39 // pred_fallthru
          _
        // Predicated region
        $region45: #{tpu_custom_call.1} parent=39 // pred_check
          %p543 = pneg %p123
        $region46: #{tpu_custom_call.1} parent=39 // pred_check_branch
          %545 = sbr.rel (%p543) target = $region48
        $region47: #{tpu_custom_call.1} parent=39 // pred_region
          %s546 = sand.u32 %s108, 1
          %s547 = scalar_lea.sflag [#allocation5], %s546
          %s548 = sand.u32 %s108, 1
          %s549 = scalar_lea.vmem [#allocation4], %s548
          %550 = dma.done %s547, 16
        $region48: #{tpu_custom_call.1} parent=39 // pred_fallthru
          _
      $region40: #{tpu_custom_call.1} parent=5 // pred_fallthru
        _
    $region6: #{tpu_custom_call.1} parent=1 // loop_footer
      %s20 = sadd.s32 1, %s16
    $region7: #{tpu_custom_call.1} parent=1 // loop_footer_branch
      %15 = sbr.rel target = $region3
    $region8: #{tpu_custom_call.1} parent=1 // loop_exit
      _
    %551 = vsyncpa [#allocation3], 1
    %s552 = scalar_lea.sflag [#allocation3], 1
    %553 = vsyncpa %s552, 1
    %554 = vsyncpa [#allocation5], 1
    %s555 = scalar_lea.sflag [#allocation5], 1
    %556 = vsyncpa %s555, 1

</llo_original>
